<compile_context>
chip_gen: v6e
topology: v6e:2x2x1
jax: 0.10.0
libtpu: 0.0.40
codegen_flags: <defaults>
</compile_context>

<pallas_src>
import functools

import jax
import jax.numpy as jnp
from jax.experimental import pallas as pl
from jax.experimental.pallas import tpu as pltpu


def _round_up(a, b):
    return ((a + b - 1) // b) * b


def regressor_kernel(x_ref, head_ref, w1x_ref, w1h_ref, b1_ref,
                     w2_ref, b2_ref, o_ref):
    # Layer 1: (TB, rdim) @ (rdim, rdim) + (TB, 3) @ (3, rdim) + bias, tanh.
    h = jnp.dot(x_ref[...], w1x_ref[...], preferred_element_type=jnp.float32)
    h = h + jnp.dot(head_ref[...], w1h_ref[...],
                    preferred_element_type=jnp.float32)
    h = jnp.tanh(h + b1_ref[...])
    # Layer 2: (TB, rdim) @ (rdim, n_out) + bias.
    o = jnp.dot(h, w2_ref[...], preferred_element_type=jnp.float32)
    o = o + b2_ref[...]
    o_ref[...] = o.astype(o_ref.dtype)


def _xla_forward(x, head, w1x, w1h, b1, w2, b2):
    h = jnp.tanh(x @ w1x + head @ w1h + b1)
    return h @ w2 + b2


def regressor_forward(x, head, w1, b1, w2, b2, *, block_b=2048,
                      min_pallas_batch=256, force_pallas=False):
    """x: (B, rdim), head: (B, 3), w1: (rdim+3, rdim), b1: (rdim,),
       w2: (rdim, n_out), b2: (n_out,) -> (B, n_out)."""
    B, rdim = x.shape
    n_head = head.shape[1]              # 3
    n_out = w2.shape[1]
    itemsize = jnp.dtype(x.dtype).itemsize

    # Split w1 once (no HBM concat of activations).
    w1x = w1[:rdim, :]                  # (rdim, rdim)
    w1h = w1[rdim:, :]                  # (3, rdim)

    # Small-batch fallback: fixed pallas_call overhead dominates there.
    if (B < min_pallas_batch) and not force_pallas:
        return _xla_forward(x, head, w1x, w1h, b1, w2, b2)

    # Batch tile: multiple of 8 (f32 sublane), capped at block_b, and chosen
    # so there are >=2 grid steps whenever B allows (v7x megacore sharding).
    B8 = _round_up(B, 8)
    half = _round_up(max(1, pl.cdiv(B8, 2)), 8)
    TB = max(8, min(block_b, half))
    B_pad = _round_up(B, TB)
    nb = B_pad // TB

    if B_pad != B:
        pad = B_pad - B
        x = jnp.pad(x, ((0, pad), (0, 0)))
        head = jnp.pad(head, ((0, pad), (0, 0)))

    b1_2d = b1.reshape(1, rdim)
    b2_2d = b2.reshape(1, n_out)

    cost = pl.CostEstimate(
        flops=(2 * B_pad * rdim * rdim
               + 2 * B_pad * n_head * rdim
               + 2 * B_pad * rdim * n_out),
        transcendentals=B_pad * rdim,
        bytes_accessed=(x.size + head.size + w1x.size + w1h.size
                        + b1_2d.size + w2.size + b2_2d.size
                        + B_pad * n_out) * itemsize,
    )

    out_padded = pl.pallas_call(
        regressor_kernel,
        out_shape=jax.ShapeDtypeStruct((B_pad, n_out), x.dtype),
        grid=(nb,),
        in_specs=[
            # Activations: tiled over batch (streamed).
            pl.BlockSpec((TB, rdim), lambda i: (i, 0)),
            pl.BlockSpec((TB, n_head), lambda i: (i, 0)),
            # Weights / biases: constant index_map -> VMEM-resident.
            pl.BlockSpec((rdim, rdim), lambda i: (0, 0)),
            pl.BlockSpec((n_head, rdim), lambda i: (0, 0)),
            pl.BlockSpec((1, rdim), lambda i: (0, 0)),
            pl.BlockSpec((rdim, n_out), lambda i: (0, 0)),
            pl.BlockSpec((1, n_out), lambda i: (0, 0)),
        ],
        out_specs=pl.BlockSpec((TB, n_out), lambda i: (i, 0)),
        compiler_params=pltpu.CompilerParams(
            dimension_semantics=("parallel",),
        ),
        cost_estimate=cost,
    )(x, head, w1x, w1h, b1_2d, w2, b2_2d)

    return out_padded[:B, :] if B_pad != B else out_padded


def reference_forward(x, head, w1, b1, w2, b2):
    xc = jnp.concatenate([x, head], axis=1)
    h = jnp.tanh(xc @ w1 + b1)
    return h @ w2 + b2


if __name__ == "__main__":
    rdim, n_out = 32, 3

    key = jax.random.PRNGKey(0)
    kx, kh, kw1, kb1, kw2, kb2 = jax.random.split(key, 6)

    # Deterministic parameter init (uniform, roughly like torch's default).
    bound1 = 1.0 / jnp.sqrt(rdim + 3.0)
    w1 = jax.random.uniform(kw1, (rdim + 3, rdim), jnp.float32, -bound1, bound1)
    b1 = jax.random.uniform(kb1, (rdim,), jnp.float32, -bound1, bound1)
    bound2 = 1.0 / jnp.sqrt(float(rdim))
    w2 = jax.random.uniform(kw2, (rdim, n_out), jnp.float32, -bound2, bound2)
    b2 = jax.random.uniform(kb2, (n_out,), jnp.float32, -bound2, bound2)

    # Test 1: small batch, force the Pallas kernel path (single grid step).
    B = 8
    x = jax.random.normal(kx, (B, rdim), dtype=jnp.float32)
    head = jax.random.normal(kh, (B, 3), dtype=jnp.float32)
    out = regressor_forward(x, head, w1, b1, w2, b2, force_pallas=True)
    out = jax.block_until_ready(out)
    ref = reference_forward(x, head, w1, b1, w2, b2)
    assert out.shape == (B, n_out)
    assert jnp.allclose(out, ref, atol=1e-5, rtol=1e-5)

    # Test 2: non-multiple-of-8 batch -> exercises batch padding + >=2 grid
    # steps in the Pallas path.
    B2 = 20
    kx2, kh2 = jax.random.split(jax.random.PRNGKey(1))
    x2 = jax.random.normal(kx2, (B2, rdim), dtype=jnp.float32)
    head2 = jax.random.normal(kh2, (B2, 3), dtype=jnp.float32)
    out2 = regressor_forward(x2, head2, w1, b1, w2, b2, force_pallas=True)
    out2 = jax.block_until_ready(out2)
    ref2 = reference_forward(x2, head2, w1, b1, w2, b2)
    assert out2.shape == (B2, n_out)
    assert jnp.allclose(out2, ref2, atol=1e-5, rtol=1e-5)

    # Test 3: small-batch XLA fallback path matches too.
    out3 = regressor_forward(x, head, w1, b1, w2, b2)
    out3 = jax.block_until_ready(out3)
    assert jnp.allclose(out3, ref, atol=1e-5, rtol=1e-5)

    print("KERNEL_OK")
</pallas_src>

<mosaic_0001>
module attributes {stable_mosaic.version = 11 : i64} {
  func.func @regressor_kernel(%arg0: i32, %arg1: memref<8x32xf32, #tpu.memory_space<vmem>>, %arg2: memref<8x3xf32, #tpu.memory_space<vmem>>, %arg3: memref<32x32xf32, #tpu.memory_space<vmem>>, %arg4: memref<3x32xf32, #tpu.memory_space<vmem>>, %arg5: memref<1x32xf32, #tpu.memory_space<vmem>>, %arg6: memref<32x3xf32, #tpu.memory_space<vmem>>, %arg7: memref<1x3xf32, #tpu.memory_space<vmem>>, %arg8: memref<8x3xf32, #tpu.memory_space<vmem>>) attributes {dimension_semantics = [#tpu.dimension_semantics<parallel>], iteration_bounds = array<i64: 1>, scalar_prefetch = 0 : i64, scratch_operands = 0 : i64, tpu.core_type = #tpu.core_type<tc>, window_params = [{transform_indices = @transform_0, window_bounds = array<i64: 8, 32>}, {transform_indices = @transform_1, window_bounds = array<i64: 8, 3>}, {pipeline_mode = #tpu.pipeline_mode<synchronous>, transform_indices = @transform_2, window_bounds = array<i64: 32, 32>}, {pipeline_mode = #tpu.pipeline_mode<synchronous>, transform_indices = @transform_3, window_bounds = array<i64: 3, 32>}, {pipeline_mode = #tpu.pipeline_mode<synchronous>, transform_indices = @transform_4, window_bounds = array<i64: 1, 32>}, {pipeline_mode = #tpu.pipeline_mode<synchronous>, transform_indices = @transform_5, window_bounds = array<i64: 32, 3>}, {pipeline_mode = #tpu.pipeline_mode<synchronous>, transform_indices = @transform_6, window_bounds = array<i64: 1, 3>}, {transform_indices = @transform_7, window_bounds = array<i64: 8, 3>}]} {
    %c0 = arith.constant 0 : index
    %c0_0 = arith.constant 0 : index
    %0 = vector.load %arg1[%c0, %c0_0] : memref<8x32xf32, #tpu.memory_space<vmem>>, vector<8x32xf32>
    %c0_1 = arith.constant 0 : index
    %c0_2 = arith.constant 0 : index
    %1 = vector.load %arg3[%c0_1, %c0_2] : memref<32x32xf32, #tpu.memory_space<vmem>>, vector<32x32xf32>
    %cst = arith.constant dense<0.000000e+00> : vector<8x32xf32>
    %2 = tpu.matmul %0, %1, %cst {dimension_numbers = #tpu.dot_dimension_numbers<[1], [0], [0], [1], [0, 0, 1, 1], [], []>} : vector<8x32xf32>, vector<32x32xf32>, vector<8x32xf32> -> vector<8x32xf32>
    %c0_3 = arith.constant 0 : index
    %c0_4 = arith.constant 0 : index
    %3 = vector.load %arg2[%c0_3, %c0_4] : memref<8x3xf32, #tpu.memory_space<vmem>>, vector<8x3xf32>
    %c0_5 = arith.constant 0 : index
    %c0_6 = arith.constant 0 : index
    %4 = vector.load %arg4[%c0_5, %c0_6] : memref<3x32xf32, #tpu.memory_space<vmem>>, vector<3x32xf32>
    %cst_7 = arith.constant dense<0.000000e+00> : vector<8x32xf32>
    %5 = tpu.matmul %3, %4, %cst_7 {dimension_numbers = #tpu.dot_dimension_numbers<[1], [0], [0], [1], [0, 0, 1, 1], [], []>} : vector<8x3xf32>, vector<3x32xf32>, vector<8x32xf32> -> vector<8x32xf32>
    %6 = arith.addf %2, %5 : vector<8x32xf32>
    %c0_8 = arith.constant 0 : index
    %c0_9 = arith.constant 0 : index
    %7 = vector.load %arg5[%c0_8, %c0_9] : memref<1x32xf32, #tpu.memory_space<vmem>>, vector<1x32xf32>
    %8 = vector.broadcast %7 : vector<1x32xf32> to vector<8x32xf32>
    %9 = arith.addf %6, %8 : vector<8x32xf32>
    %10 = math.tanh %9 : vector<8x32xf32>
    %c0_10 = arith.constant 0 : index
    %c0_11 = arith.constant 0 : index
    %11 = vector.load %arg6[%c0_10, %c0_11] : memref<32x3xf32, #tpu.memory_space<vmem>>, vector<32x3xf32>
    %cst_12 = arith.constant dense<0.000000e+00> : vector<8x3xf32>
    %12 = tpu.matmul %10, %11, %cst_12 {dimension_numbers = #tpu.dot_dimension_numbers<[1], [0], [0], [1], [0, 0, 1, 1], [], []>} : vector<8x32xf32>, vector<32x3xf32>, vector<8x3xf32> -> vector<8x3xf32>
    %c0_13 = arith.constant 0 : index
    %c0_14 = arith.constant 0 : index
    %13 = vector.load %arg7[%c0_13, %c0_14] : memref<1x3xf32, #tpu.memory_space<vmem>>, vector<1x3xf32>
    %14 = vector.broadcast %13 : vector<1x3xf32> to vector<8x3xf32>
    %15 = arith.addf %12, %14 : vector<8x3xf32>
    %c0_15 = arith.constant 0 : index
    %c0_16 = arith.constant 0 : index
    %16 = vector.load %arg8[%c0_15, %c0_16] : memref<8x3xf32, #tpu.memory_space<vmem>>, vector<8x3xf32>
    tpu.vector_store %arg8[%c0_15, %c0_16], %15 {strides = array<i32>} : memref<8x3xf32, #tpu.memory_space<vmem>>, vector<8x3xf32>,
    return
  }
  func.func @transform_0(%arg0: i32) -> (i32, i32) {
    %c0_i32 = arith.constant 0 : i32
    %c0_i32_0 = arith.constant 0 : i32
    return %arg0, %c0_i32 : i32, i32
  }
  func.func @transform_1(%arg0: i32) -> (i32, i32) {
    %c0_i32 = arith.constant 0 : i32
    %c0_i32_0 = arith.constant 0 : i32
    return %arg0, %c0_i32 : i32, i32
  }
  func.func @transform_2(%arg0: i32) -> (i32, i32) {
    %c0_i32 = arith.constant 0 : i32
    %c0_i32_0 = arith.constant 0 : i32
    %c0_i32_1 = arith.constant 0 : i32
    return %c0_i32, %c0_i32_0 : i32, i32
  }
  func.func @transform_3(%arg0: i32) -> (i32, i32) {
    %c0_i32 = arith.constant 0 : i32
    %c0_i32_0 = arith.constant 0 : i32
    %c0_i32_1 = arith.constant 0 : i32
    return %c0_i32, %c0_i32_0 : i32, i32
  }
  func.func @transform_4(%arg0: i32) -> (i32, i32) {
    %c0_i32 = arith.constant 0 : i32
    %c0_i32_0 = arith.constant 0 : i32
    %c0_i32_1 = arith.constant 0 : i32
    return %c0_i32, %c0_i32_0 : i32, i32
  }
  func.func @transform_5(%arg0: i32) -> (i32, i32) {
    %c0_i32 = arith.constant 0 : i32
    %c0_i32_0 = arith.constant 0 : i32
    %c0_i32_1 = arith.constant 0 : i32
    return %c0_i32, %c0_i32_0 : i32, i32
  }
  func.func @transform_6(%arg0: i32) -> (i32, i32) {
    %c0_i32 = arith.constant 0 : i32
    %c0_i32_0 = arith.constant 0 : i32
    %c0_i32_1 = arith.constant 0 : i32
    return %c0_i32, %c0_i32_0 : i32, i32
  }
  func.func @transform_7(%arg0: i32) -> (i32, i32) {
    %c0_i32 = arith.constant 0 : i32
    %c0_i32_0 = arith.constant 0 : i32
    return %arg0, %c0_i32 : i32, i32
  }
}

</mosaic_0001>

<llo_original>
// kernel: tpu_custom_call.1
$region0: #{tpu_custom_call.1}
  #allocation0 [shape = 'u32[]', space=smem, size = 0x4, offset = 0x4, fixed_abs, tag = 'smem constant byte address 0x4 - core index']
  #allocation1 [shape = 'u32[144,128]{1,0:T(1,128)}', space=vmem, size = 0x12000, scoped, tag = 'internal scratch']
  %s0 = inlined_call_operand.vmem [shape: f32[8,32], index: 0, kind: input, shape index: {}]
  %s1 = inlined_call_operand.vmem [shape: f32[8,3], index: 1, kind: input, shape index: {}]
  %s2 = inlined_call_operand.vmem [shape: f32[32,32], index: 2, kind: input, shape index: {}]
  %s3 = inlined_call_operand.vmem [shape: f32[3,32], index: 3, kind: input, shape index: {}]
  %s4 = inlined_call_operand.vmem [shape: f32[1,32], index: 4, kind: input, shape index: {}]
  %s5 = inlined_call_operand.vmem [shape: f32[32,3], index: 5, kind: input, shape index: {}]
  %s6 = inlined_call_operand.vmem [shape: f32[1,3], index: 6, kind: input, shape index: {}]
  %s7 = inlined_call_operand.vmem [shape: f32[8,3], index: 7, kind: output, shape index: {}]
  %s8 = sld [smem:[#allocation0]]
  $region38: #{tpu_custom_call.1} parent=0
    _
  %s10 = ssub.s32 1, %s8
  %s11 = scalar_select 0, %s10, %s8
  // Predicated region
  $region2: #{tpu_custom_call.1} parent=0 // pred_check
    _
  $region3: #{tpu_custom_call.1} parent=0 // pred_check_branch
    %13 = sbr.rel (0) target = $region5
  $region4: #{tpu_custom_call.1} parent=0 // pred_region
    _
  $region5: #{tpu_custom_call.1} parent=0 // pred_fallthru
    _
  // Predicated region
  $region6: #{tpu_custom_call.1} parent=0 // pred_check
    _
  $region7: #{tpu_custom_call.1} parent=0 // pred_check_branch
    %15 = sbr.rel (0) target = $region9
  $region8: #{tpu_custom_call.1} parent=0 // pred_region
    _
  $region9: #{tpu_custom_call.1} parent=0 // pred_fallthru
    _
  // Predicated region
  $region10: #{tpu_custom_call.1} parent=0 // pred_check
    _
  $region11: #{tpu_custom_call.1} parent=0 // pred_check_branch
    %17 = sbr.rel (0) target = $region13
  $region12: #{tpu_custom_call.1} parent=0 // pred_region
    _
  $region13: #{tpu_custom_call.1} parent=0 // pred_fallthru
    _
  // Predicated region
  $region14: #{tpu_custom_call.1} parent=0 // pred_check
    _
  $region15: #{tpu_custom_call.1} parent=0 // pred_check_branch
    %19 = sbr.rel (0) target = $region17
  $region16: #{tpu_custom_call.1} parent=0 // pred_region
    _
  $region17: #{tpu_custom_call.1} parent=0 // pred_fallthru
    _
  // Predicated region
  $region18: #{tpu_custom_call.1} parent=0 // pred_check
    _
  $region19: #{tpu_custom_call.1} parent=0 // pred_check_branch
    %21 = sbr.rel (0) target = $region21
  $region20: #{tpu_custom_call.1} parent=0 // pred_region
    _
  $region21: #{tpu_custom_call.1} parent=0 // pred_fallthru
    _
  // Predicated region
  $region22: #{tpu_custom_call.1} parent=0 // pred_check
    _
  $region23: #{tpu_custom_call.1} parent=0 // pred_check_branch
    %23 = sbr.rel (0) target = $region25
  $region24: #{tpu_custom_call.1} parent=0 // pred_region
    _
  $region25: #{tpu_custom_call.1} parent=0 // pred_fallthru
    _
  // Predicated region
  $region26: #{tpu_custom_call.1} parent=0 // pred_check
    _
  $region27: #{tpu_custom_call.1} parent=0 // pred_check_branch
    %25 = sbr.rel (0) target = $region29
  $region28: #{tpu_custom_call.1} parent=0 // pred_region
    _
  $region29: #{tpu_custom_call.1} parent=0 // pred_fallthru
    _
  %v26 = vld [vmem:[%s0] sm:$0xff]
  %v27 = vld [vmem:[%s2] sm:$0xff]
  %v28 = vld [vmem:[%s2 + $0x8] sm:$0xff]
  %v29 = vld [vmem:[%s2 + $0x10] sm:$0xff]
  %v30 = vld [vmem:[%s2 + $0x18] sm:$0xff]
  %v31 = vld [vmem:[%s1] sm:$0xff]
  %v32 = vld [vmem:[%s3] sm:$0x7]
  %vm33 = vcmask 23552
  %v35 = vsel %vm33, %v31, 0
  %vm37 = vcmask 1042432
  %v39 = vsel %vm37, %v32, 0
  %41 = vmatprep.subr.mxu0 0.0
  %42 = vmatpush1.msra.mxu0 0.0
  %43 = vmatprep.subr.mxu0 0.0
  %44 = vmatpush1.msra.mxu0 0.0
  %45 = vmatprep.subr.mxu0 0.0
  %46 = vmatpush1.msra.mxu0 0.0
  %47 = vmatprep.subr.mxu0 0.0
  %48 = vmatpush1.msra.mxu0 0.0
  %49 = vmatprep.subr.mxu0 0.0
  %50 = vmatpush1.msra.mxu0 0.0
  %51 = vmatprep.subr.mxu0 0.0
  %52 = vmatpush1.msra.mxu0 0.0
  %53 = vmatprep.subr.mxu0 0.0
  %54 = vmatpush1.msra.mxu0 0.0
  %55 = vmatprep.subr.mxu0 0.0
  %56 = vmatpush1.msra.mxu0 0.0
  %57 = vmatprep.subr.mxu0 0.0
  %58 = vmatpush1.msra.mxu0 0.0
  %59 = vmatprep.subr.mxu0 0.0
  %60 = vmatpush1.msra.mxu0 0.0
  %61 = vmatprep.subr.mxu0 0.0
  %62 = vmatpush1.msra.mxu0 0.0
  %63 = vmatprep.subr.mxu0 0.0
  %64 = vmatpush1.msra.mxu0 0.0
  %65 = vmatprep.subr.mxu0 0.0
  %66 = vmatpush1.msra.mxu0 0.0
  %67 = vmatprep.subr.mxu0 0.0
  %68 = vmatpush1.msra.mxu0 0.0
  %69 = vmatprep.subr.mxu0 0.0
  %70 = vmatpush1.msra.mxu0 0.0
  %71 = vmatprep.subr.mxu0 0.0
  %72 = vmatpush1.msra.mxu0 %v39
  %73 = vmatprep.subr.mxu0 0.0
  %74 = vmatpush2.msra.mxu0 0.0
  %75 = vmatprep.subr.mxu0 0.0
  %76 = vmatpush2.msra.mxu0 0.0
  %77 = vmatprep.subr.mxu0 0.0
  %78 = vmatpush2.msra.mxu0 0.0
  %79 = vmatprep.subr.mxu0 0.0
  %80 = vmatpush2.msra.mxu0 0.0
  %81 = vmatprep.subr.mxu0 0.0
  %82 = vmatpush2.msra.mxu0 0.0
  %83 = vmatprep.subr.mxu0 0.0
  %84 = vmatpush2.msra.mxu0 0.0
  %85 = vmatprep.subr.mxu0 0.0
  %86 = vmatpush2.msra.mxu0 0.0
  %87 = vmatprep.subr.mxu0 0.0
  %88 = vmatpush2.msra.mxu0 0.0
  %89 = vmatprep.subr.mxu0 0.0
  %90 = vmatpush2.msra.mxu0 0.0
  %91 = vmatprep.subr.mxu0 0.0
  %92 = vmatpush2.msra.mxu0 0.0
  %93 = vmatprep.subr.mxu0 0.0
  %94 = vmatpush2.msra.mxu0 0.0
  %95 = vmatprep.subr.mxu0 0.0
  %96 = vmatpush2.msra.mxu0 0.0
  %97 = vmatprep.subr.mxu0 0.0
  %98 = vmatpush2.msra.mxu0 0.0
  %99 = vmatprep.subr.mxu0 0.0
  %100 = vmatpush2.msra.mxu0 0.0
  %101 = vmatprep.subr.mxu0 0.0
  %102 = vmatpush2.msra.mxu0 0.0
  %103 = vmatprep.subr.mxu0 0.0
  %104 = vmatpush2.msra.mxu0 0.0
  %105 = vmatprep.mubr.f32.mxu0 0.0
  %106 = vmatmul.mubr.f32.gmra.mxu0 %v35
  %v107 = vpop.f32.mrf.mxu0
  %v108 = vadd.f32 0.0, %v107
  %v109 = vpop.f32.mrf.mxu0
  %110 = vdwg.mxu0
  %vm111 = vcmask 261120
  %v113 = vsel %vm111, %v26, 0
  %115 = vmatprep.subr.mxu0 0.0
  %116 = vmatpush1.msra.mxu0 0.0
  %117 = vmatprep.subr.mxu0 0.0
  %118 = vmatpush1.msra.mxu0 0.0
  %119 = vmatprep.subr.mxu0 0.0
  %120 = vmatpush1.msra.mxu0 0.0
  %121 = vmatprep.subr.mxu0 0.0
  %122 = vmatpush1.msra.mxu0 0.0
  %123 = vmatprep.subr.mxu0 0.0
  %124 = vmatpush1.msra.mxu0 0.0
  %125 = vmatprep.subr.mxu0 0.0
  %126 = vmatpush1.msra.mxu0 0.0
  %127 = vmatprep.subr.mxu0 0.0
  %128 = vmatpush1.msra.mxu0 0.0
  %129 = vmatprep.subr.mxu0 0.0
  %130 = vmatpush1.msra.mxu0 0.0
  %131 = vmatprep.subr.mxu0 0.0
  %132 = vmatpush1.msra.mxu0 0.0
  %133 = vmatprep.subr.mxu0 0.0
  %134 = vmatpush1.msra.mxu0 0.0
  %135 = vmatprep.subr.mxu0 0.0
  %136 = vmatpush1.msra.mxu0 0.0
  %137 = vmatprep.subr.mxu0 0.0
  %138 = vmatpush1.msra.mxu0 0.0
  %139 = vmatprep.subr.mxu0 0.0
  %140 = vmatpush1.msra.mxu0 %v30
  %141 = vmatprep.subr.mxu0 0.0
  %142 = vmatpush1.msra.mxu0 %v29
  %143 = vmatprep.subr.mxu0 0.0
  %144 = vmatpush1.msra.mxu0 %v28
  %145 = vmatprep.subr.mxu0 0.0
  %146 = vmatpush1.msra.mxu0 %v27
  %147 = vmatprep.subr.mxu0 0.0
  %148 = vmatpush2.msra.mxu0 0.0
  %149 = vmatprep.subr.mxu0 0.0
  %150 = vmatpush2.msra.mxu0 0.0
  %151 = vmatprep.subr.mxu0 0.0
  %152 = vmatpush2.msra.mxu0 0.0
  %153 = vmatprep.subr.mxu0 0.0
  %154 = vmatpush2.msra.mxu0 0.0
  %155 = vmatprep.subr.mxu0 0.0
  %156 = vmatpush2.msra.mxu0 0.0
  %157 = vmatprep.subr.mxu0 0.0
  %158 = vmatpush2.msra.mxu0 0.0
  %159 = vmatprep.subr.mxu0 0.0
  %160 = vmatpush2.msra.mxu0 0.0
  %161 = vmatprep.subr.mxu0 0.0
  %162 = vmatpush2.msra.mxu0 0.0
  %163 = vmatprep.subr.mxu0 0.0
  %164 = vmatpush2.msra.mxu0 0.0
  %165 = vmatprep.subr.mxu0 0.0
  %166 = vmatpush2.msra.mxu0 0.0
  %167 = vmatprep.subr.mxu0 0.0
  %168 = vmatpush2.msra.mxu0 0.0
  %169 = vmatprep.subr.mxu0 0.0
  %170 = vmatpush2.msra.mxu0 0.0
  %171 = vmatprep.subr.mxu0 0.0
  %172 = vmatpush2.msra.mxu0 0.0
  %173 = vmatprep.subr.mxu0 0.0
  %174 = vmatpush2.msra.mxu0 0.0
  %175 = vmatprep.subr.mxu0 0.0
  %176 = vmatpush2.msra.mxu0 0.0
  %177 = vmatprep.subr.mxu0 0.0
  %178 = vmatpush2.msra.mxu0 0.0
  %179 = vmatprep.mubr.f32.mxu0 0.0
  %180 = vmatmul.mubr.f32.gmra.mxu0 %v113
  %v181 = vpop.f32.mrf.mxu0
  %v182 = vadd.f32 %v108, %v181
  %v183 = vpop.f32.mrf.mxu0
  %184 = vdwg.mxu0
  %v185 = vld [vmem:[%s4] sm:$0x1]
  %v187 = vlaneseq
  %v188 = vshrl.u32 %v187, 7
  %v189 = vsub.s32 0, %v188
  %v190 = vrot.slane %v185, %v189
  %v192 = vadd.f32 %v182, %v190
  %v193 = vtanh.pop %v192
  %v194 = vld [vmem:[%s5] sm:$0xff]
  %v195 = vld [vmem:[%s5 + $0x8] sm:$0xff]
  %v196 = vld [vmem:[%s5 + $0x10] sm:$0xff]
  %v197 = vld [vmem:[%s5 + $0x18] sm:$0xff]
  %v198 = vld [vmem:[%s6] sm:$0x1]
  %v200 = vlaneseq
  %v201 = vshrl.u32 %v200, 7
  %v202 = vsub.s32 0, %v201
  %v203 = vrot.slane %v198, %v202
  %v206 = vsel %vm111, %v193, 0
  %208 = vmatprep.subr.mxu0 0.0
  %209 = vmatpush1.msra.mxu0 0.0
  %210 = vmatprep.subr.mxu0 0.0
  %211 = vmatpush1.msra.mxu0 0.0
  %212 = vmatprep.subr.mxu0 0.0
  %213 = vmatpush1.msra.mxu0 0.0
  %214 = vmatprep.subr.mxu0 0.0
  %215 = vmatpush1.msra.mxu0 0.0
  %216 = vmatprep.subr.mxu0 0.0
  %217 = vmatpush1.msra.mxu0 0.0
  %218 = vmatprep.subr.mxu0 0.0
  %219 = vmatpush1.msra.mxu0 0.0
  %220 = vmatprep.subr.mxu0 0.0
  %221 = vmatpush1.msra.mxu0 0.0
  %222 = vmatprep.subr.mxu0 0.0
  %223 = vmatpush1.msra.mxu0 0.0
  %224 = vmatprep.subr.mxu0 0.0
  %225 = vmatpush1.msra.mxu0 0.0
  %226 = vmatprep.subr.mxu0 0.0
  %227 = vmatpush1.msra.mxu0 0.0
  %228 = vmatprep.subr.mxu0 0.0
  %229 = vmatpush1.msra.mxu0 0.0
  %230 = vmatprep.subr.mxu0 0.0
  %231 = vmatpush1.msra.mxu0 0.0
  %232 = vmatprep.subr.mxu0 0.0
  %233 = vmatpush1.msra.mxu0 %v197
  %234 = vmatprep.subr.mxu0 0.0
  %235 = vmatpush1.msra.mxu0 %v196
  %236 = vmatprep.subr.mxu0 0.0
  %237 = vmatpush1.msra.mxu0 %v195
  %238 = vmatprep.subr.mxu0 0.0
  %239 = vmatpush1.msra.mxu0 %v194
  %240 = vmatprep.subr.mxu0 0.0
  %241 = vmatpush2.msra.mxu0 0.0
  %242 = vmatprep.subr.mxu0 0.0
  %243 = vmatpush2.msra.mxu0 0.0
  %244 = vmatprep.subr.mxu0 0.0
  %245 = vmatpush2.msra.mxu0 0.0
  %246 = vmatprep.subr.mxu0 0.0
  %247 = vmatpush2.msra.mxu0 0.0
  %248 = vmatprep.subr.mxu0 0.0
  %249 = vmatpush2.msra.mxu0 0.0
  %250 = vmatprep.subr.mxu0 0.0
  %251 = vmatpush2.msra.mxu0 0.0
  %252 = vmatprep.subr.mxu0 0.0
  %253 = vmatpush2.msra.mxu0 0.0
  %254 = vmatprep.subr.mxu0 0.0
  %255 = vmatpush2.msra.mxu0 0.0
  %256 = vmatprep.subr.mxu0 0.0
  %257 = vmatpush2.msra.mxu0 0.0
  %258 = vmatprep.subr.mxu0 0.0
  %259 = vmatpush2.msra.mxu0 0.0
  %260 = vmatprep.subr.mxu0 0.0
  %261 = vmatpush2.msra.mxu0 0.0
  %262 = vmatprep.subr.mxu0 0.0
  %263 = vmatpush2.msra.mxu0 0.0
  %264 = vmatprep.subr.mxu0 0.0
  %265 = vmatpush2.msra.mxu0 0.0
  %266 = vmatprep.subr.mxu0 0.0
  %267 = vmatpush2.msra.mxu0 0.0
  %268 = vmatprep.subr.mxu0 0.0
  %269 = vmatpush2.msra.mxu0 0.0
  %270 = vmatprep.subr.mxu0 0.0
  %271 = vmatpush2.msra.mxu0 0.0
  %272 = vmatprep.mubr.f32.mxu0 0.0
  %273 = vmatmul.mubr.f32.gmra.mxu0 %v206
  %v274 = vpop.f32.mrf.mxu0
  %v275 = vadd.f32 %v203, %v274
  %v276 = vpop.f32.mrf.mxu0
  %277 = vdwg.mxu0
  %278 = vst.msk [vmem:[%s7] sm:$0xff] %vm33, %v275
  // Predicated region
  $region30: #{tpu_custom_call.1} parent=0 // pred_check
    _
  $region31: #{tpu_custom_call.1} parent=0 // pred_check_branch
    %280 = sbr.rel (0) target = $region33
  $region32: #{tpu_custom_call.1} parent=0 // pred_region
    _
  $region33: #{tpu_custom_call.1} parent=0 // pred_fallthru
    _
  // Predicated region
  $region34: #{tpu_custom_call.1} parent=0 // pred_check
    _
  $region35: #{tpu_custom_call.1} parent=0 // pred_check_branch
    %282 = sbr.rel (0) target = $region37
  $region36: #{tpu_custom_call.1} parent=0 // pred_region
    _
  $region37: #{tpu_custom_call.1} parent=0 // pred_fallthru
    _

</llo_original>
